<compile_context>
chip_gen: v7x
topology: tpu7x:2x2x1
jax: 0.10.0
libtpu: 0.0.40
codegen_flags: <defaults>
</compile_context>

<pallas_src>
import functools

import jax
import jax.numpy as jnp
from jax.experimental import pallas as pl
from jax.experimental.pallas import tpu as pltpu

_OUT_PAD = 128  # lane-dense padding width for the 2-wide output head


def _sigmoid(x):
    # Logistic via tanh: single EUP push per element instead of exp + divide
    # on the VALU (EUP slot has slack in this kernel).
    return 0.5 * jnp.tanh(0.5 * x) + 0.5


def _softplus(x):
    # Stable softplus; matches torch.nn.Softplus(beta=1) to < 2e-9.
    return jnp.maximum(x, 0.0) + jnp.log(1.0 + jnp.exp(-jnp.abs(x)))


def _norm_lstmb_kernel(xn_ref, h_ref, c_ref,
                       wih_ref, whh_ref, bg_ref,
                       wlll_ref, blll_ref, wlin_ref, blin_ref,
                       out_ref, hnew_ref, cnew_ref):
    xn = xn_ref[...]                                            # (Bt, 1) already normalised
    h = h_ref[...]                                              # (Bt, dim)
    c = c_ref[...]                                              # (Bt, dim)
    d = h.shape[1]

    # LSTMCell gates, PyTorch order [i, f, g, o].  input_size == 1, so the
    # input projection is a broadcast multiply on the VPU; only h @ W_hh^T
    # hits the MXU.  b_ih + b_hh were pre-combined in the wrapper.
    gates = (xn * wih_ref[...]
             + jnp.dot(h, whh_ref[...], preferred_element_type=jnp.float32)
             + bg_ref[...])                                     # (Bt, 4*dim)

    i_g = _sigmoid(gates[:, 0 * d:1 * d])
    f_g = _sigmoid(gates[:, 1 * d:2 * d])
    g_g = jnp.tanh(gates[:, 2 * d:3 * d])
    o_g = _sigmoid(gates[:, 3 * d:4 * d])

    c_new = f_g * c + i_g * g_g
    h_new = o_g * jnp.tanh(c_new)

    # out = softplus(linear(relu(lll(c_new)))); final matmul is padded to a
    # full 128-lane N tile so the output store is an unmasked, lane-dense vst.
    z = jnp.dot(c_new, wlll_ref[...],
                preferred_element_type=jnp.float32) + blll_ref[...]
    z = jnp.maximum(z, 0.0)
    logits = jnp.dot(z, wlin_ref[...],
                     preferred_element_type=jnp.float32) + blin_ref[...]

    out_ref[...] = _softplus(logits)                            # (Bt, 128), cols >=2 sliced off
    hnew_ref[...] = h_new
    cnew_ref[...] = c_new


def _pick_block_b(B):
    # Prefer large tiles (amortise ~0.35 us per grid step) but keep >= 2 grid
    # steps when possible so both v7x TensorCores get work.
    candidates = (512, 256, 128, 64, 32, 16, 8)
    for bt in candidates:
        if B % bt == 0 and B // bt >= 2:
            return bt
    for bt in candidates:
        if B % bt == 0:
            return bt
    return B


@functools.partial(jax.jit, static_argnames=("block_b",))
def norm_lstmb_forward(b, c_arg, hidden, cellstate, params, block_b=None):
    """b: (m, B)  c_arg: unused (matches the torch signature)
    hidden/cellstate: (B, dim).  Returns (out (B,2), hidden' (B,dim), cell' (B,dim))."""
    del c_arg  # unused by NormLSTMB.forward, kept for signature fidelity
    m, B = b.shape
    dim = hidden.shape[1]

    # First-call normaliser init (stateful in the torch module) + the input
    # normalisation itself, done once in the wrapper so the kernel never has
    # to stream b at all.
    bl1 = jnp.sum(jnp.abs(b), axis=0)                     # (B,)
    mean = jnp.mean(bl1)
    std = jnp.std(bl1, ddof=1)                            # torch .std() is unbiased
    xn = ((bl1 - mean) / std)[:, None].astype(jnp.float32)   # (B, 1)

    bt = block_b if block_b is not None else _pick_block_b(B)
    assert B % bt == 0, "batch must be divisible by the batch block"
    nb = B // bt

    # Lane-dense re-layouts (done once in the wrapper).
    wih_row = params["w_ih"].reshape(1, 4 * dim)           # (4*dim,1) -> (1,4*dim)
    whh_t = params["w_hh"].T                               # (dim, 4*dim)
    b_gates = (params["b_ih"] + params["b_hh"]).reshape(1, 4 * dim)
    wlll_t = params["w_lll"].T                             # (dim, dim)
    b_lll = params["b_lll"].reshape(1, dim)
    # Zero-pad the 2-wide head to a full 128-lane tile (unmasked stores,
    # full-N MXU tile); the padded logits are sliced away after the call.
    wlin_pad = jnp.zeros((dim, _OUT_PAD), jnp.float32).at[:, :2].set(
        params["w_lin"].T)
    blin_pad = jnp.zeros((1, _OUT_PAD), jnp.float32).at[0, :2].set(
        params["b_lin"])

    def const(shape):
        return pl.BlockSpec(shape, lambda i: (0, 0))       # weight stays resident

    in_specs = [
        pl.BlockSpec((bt, 1), lambda i: (i, 0)),            # xn (pre-normalised)
        pl.BlockSpec((bt, dim), lambda i: (i, 0)),           # hidden
        pl.BlockSpec((bt, dim), lambda i: (i, 0)),           # cellstate
        const((1, 4 * dim)),                                 # w_ih (row)
        const((dim, 4 * dim)),                               # w_hh^T
        const((1, 4 * dim)),                                 # b_ih + b_hh
        const((dim, dim)),                                   # w_lll^T
        const((1, dim)),                                     # b_lll
        const((dim, _OUT_PAD)),                              # w_lin^T (padded)
        const((1, _OUT_PAD)),                                # b_lin (padded)
    ]
    out_specs = (
        pl.BlockSpec((bt, _OUT_PAD), lambda i: (i, 0)),
        pl.BlockSpec((bt, dim), lambda i: (i, 0)),
        pl.BlockSpec((bt, dim), lambda i: (i, 0)),
    )
    out_shape = (
        jax.ShapeDtypeStruct((B, _OUT_PAD), jnp.float32),
        jax.ShapeDtypeStruct((B, dim), jnp.float32),
        jax.ShapeDtypeStruct((B, dim), jnp.float32),
    )

    # Advisory cost estimate so XLA schedules the surrounding ops sensibly.
    flops = 2 * B * dim * (4 * dim + dim + _OUT_PAD)
    transcendentals = B * (5 * dim + 2 * _OUT_PAD)
    weight_elems = (4 * dim + dim * 4 * dim + 4 * dim + dim * dim + dim
                    + dim * _OUT_PAD + _OUT_PAD)
    bytes_accessed = 4 * (B + 2 * B * dim + weight_elems
                          + 2 * B * dim + B * _OUT_PAD)

    out_pad, h_new, c_new = pl.pallas_call(
        _norm_lstmb_kernel,
        out_shape=out_shape,
        grid=(nb,),
        in_specs=in_specs,
        out_specs=out_specs,
        compiler_params=pltpu.CompilerParams(
            dimension_semantics=("parallel",)),
        cost_estimate=pl.CostEstimate(
            flops=flops,
            transcendentals=transcendentals,
            bytes_accessed=bytes_accessed),
    )(xn, hidden, cellstate, wih_row, whh_t, b_gates,
      wlll_t, b_lll, wlin_pad, blin_pad)

    return out_pad[:, :2], h_new, c_new


def norm_lstmb_reference(b, hidden, cellstate, params):
    """Pure-JAX reference of the same forward semantics (correctness check)."""
    dim = hidden.shape[1]
    bl1 = jnp.sum(jnp.abs(b), axis=0)
    mean = jnp.mean(bl1)
    std = jnp.std(bl1, ddof=1)
    x = ((bl1 - mean) / std)[:, None]                       # (B, 1)

    gates = (jnp.dot(x, params["w_ih"].T) + params["b_ih"]
             + jnp.dot(hidden, params["w_hh"].T) + params["b_hh"])
    i_g = jax.nn.sigmoid(gates[:, 0 * dim:1 * dim])
    f_g = jax.nn.sigmoid(gates[:, 1 * dim:2 * dim])
    g_g = jnp.tanh(gates[:, 2 * dim:3 * dim])
    o_g = jax.nn.sigmoid(gates[:, 3 * dim:4 * dim])

    c_new = f_g * cellstate + i_g * g_g
    h_new = o_g * jnp.tanh(c_new)

    z = jnp.maximum(jnp.dot(c_new, params["w_lll"].T) + params["b_lll"], 0.0)
    logits = jnp.dot(z, params["w_lin"].T) + params["b_lin"]
    return _softplus(logits), h_new, c_new


if __name__ == "__main__":
    # Small shapes consistent with the module: batch=16, b has 64 rows to
    # L1-reduce over, LSTM/hidden width = module default dim=128.
    B, m, dim = 16, 64, 128

    key = jax.random.PRNGKey(0)
    keys = jax.random.split(key, 12)
    scale = 1.0 / jnp.sqrt(jnp.float32(dim))   # ~ PyTorch's uniform(+-1/sqrt(dim))

    params = {
        "w_ih": jax.random.normal(keys[0], (4 * dim, 1), jnp.float32) * scale,
        "w_hh": jax.random.normal(keys[1], (4 * dim, dim), jnp.float32) * scale,
        "b_ih": jax.random.normal(keys[2], (4 * dim,), jnp.float32) * scale,
        "b_hh": jax.random.normal(keys[3], (4 * dim,), jnp.float32) * scale,
        "w_lll": jax.random.normal(keys[4], (dim, dim), jnp.float32) * scale,
        "b_lll": jax.random.normal(keys[5], (dim,), jnp.float32) * scale,
        "w_lin": jax.random.normal(keys[6], (2, dim), jnp.float32) * scale,
        "b_lin": jax.random.normal(keys[7], (2,), jnp.float32) * scale,
    }

    # Module parameters `hidden` / `cellstate` repeated to batch (get_initial).
    hidden0 = jnp.tile(jax.random.normal(keys[8], (1, dim), jnp.float32), (B, 1))
    cell0 = jnp.tile(jax.random.normal(keys[9], (1, dim), jnp.float32), (B, 1))

    b = jax.random.normal(keys[10], (m, B), jnp.float32)
    c_arg = jax.random.normal(keys[11], (m, B), jnp.float32)  # unused by forward

    # block_b=8 -> grid of 2 batch tiles (exercises pipelining / parallel axis).
    # Production batches should rely on _pick_block_b (>=128, ideally 256-512).
    out, h_new, c_new = norm_lstmb_forward(b, c_arg, hidden0, cell0, params,
                                           block_b=8)
    out, h_new, c_new = jax.block_until_ready((out, h_new, c_new))

    out_r, h_r, c_r = norm_lstmb_reference(b, hidden0, cell0, params)

    assert out.shape == (B, 2)
    assert h_new.shape == (B, dim) and c_new.shape == (B, dim)
    assert bool(jnp.all(jnp.isfinite(out)))
    assert bool(jnp.all(jnp.isfinite(h_new))) and bool(jnp.all(jnp.isfinite(c_new)))
    # Tolerance slack covers MXU f32 multi-pass vs XLA default-precision dots.
    assert jnp.allclose(out, out_r, rtol=1e-2, atol=1e-2), "out mismatch"
    assert jnp.allclose(h_new, h_r, rtol=1e-2, atol=1e-2), "hidden mismatch"
    assert jnp.allclose(c_new, c_r, rtol=1e-2, atol=1e-2), "cellstate mismatch"

    print("KERNEL_OK")
</pallas_src>

<mosaic_0001>
module attributes {stable_mosaic.version = 11 : i64} {
  func.func @_norm_lstmb_kernel(%arg0: i32, %arg1: memref<8x1xf32, #tpu.memory_space<vmem>>, %arg2: memref<8x128xf32, #tpu.memory_space<vmem>>, %arg3: memref<8x128xf32, #tpu.memory_space<vmem>>, %arg4: memref<1x512xf32, #tpu.memory_space<vmem>>, %arg5: memref<128x512xf32, #tpu.memory_space<vmem>>, %arg6: memref<1x512xf32, #tpu.memory_space<vmem>>, %arg7: memref<128x128xf32, #tpu.memory_space<vmem>>, %arg8: memref<1x128xf32, #tpu.memory_space<vmem>>, %arg9: memref<128x128xf32, #tpu.memory_space<vmem>>, %arg10: memref<1x128xf32, #tpu.memory_space<vmem>>, %arg11: memref<8x128xf32, #tpu.memory_space<vmem>>, %arg12: memref<8x128xf32, #tpu.memory_space<vmem>>, %arg13: memref<8x128xf32, #tpu.memory_space<vmem>>) attributes {dimension_semantics = [#tpu.dimension_semantics<parallel>], iteration_bounds = array<i64: 2>, scalar_prefetch = 0 : i64, scratch_operands = 0 : i64, tpu.core_type = #tpu.core_type<tc>, window_params = [{transform_indices = @transform_0, window_bounds = array<i64: 8, 1>}, {transform_indices = @transform_1, window_bounds = array<i64: 8, 128>}, {transform_indices = @transform_2, window_bounds = array<i64: 8, 128>}, {pipeline_mode = #tpu.pipeline_mode<synchronous>, transform_indices = @transform_3, window_bounds = array<i64: 1, 512>}, {pipeline_mode = #tpu.pipeline_mode<synchronous>, transform_indices = @transform_4, window_bounds = array<i64: 128, 512>}, {pipeline_mode = #tpu.pipeline_mode<synchronous>, transform_indices = @transform_5, window_bounds = array<i64: 1, 512>}, {pipeline_mode = #tpu.pipeline_mode<synchronous>, transform_indices = @transform_6, window_bounds = array<i64: 128, 128>}, {pipeline_mode = #tpu.pipeline_mode<synchronous>, transform_indices = @transform_7, window_bounds = array<i64: 1, 128>}, {pipeline_mode = #tpu.pipeline_mode<synchronous>, transform_indices = @transform_8, window_bounds = array<i64: 128, 128>}, {pipeline_mode = #tpu.pipeline_mode<synchronous>, transform_indices = @transform_9, window_bounds = array<i64: 1, 128>}, {transform_indices = @transform_10, window_bounds = array<i64: 8, 128>}, {transform_indices = @transform_11, window_bounds = array<i64: 8, 128>}, {transform_indices = @transform_12, window_bounds = array<i64: 8, 128>}]} {
    %c0 = arith.constant 0 : index
    %c0_0 = arith.constant 0 : index
    %0 = vector.load %arg1[%c0, %c0_0] : memref<8x1xf32, #tpu.memory_space<vmem>>, vector<8x1xf32>
    %c0_1 = arith.constant 0 : index
    %c0_2 = arith.constant 0 : index
    %1 = vector.load %arg2[%c0_1, %c0_2] : memref<8x128xf32, #tpu.memory_space<vmem>>, vector<8x128xf32>
    %c0_3 = arith.constant 0 : index
    %c0_4 = arith.constant 0 : index
    %2 = vector.load %arg3[%c0_3, %c0_4] : memref<8x128xf32, #tpu.memory_space<vmem>>, vector<8x128xf32>
    %c0_5 = arith.constant 0 : index
    %c0_6 = arith.constant 0 : index
    %3 = vector.load %arg4[%c0_5, %c0_6] : memref<1x512xf32, #tpu.memory_space<vmem>>, vector<1x512xf32>
    %4 = vector.broadcast %0 : vector<8x1xf32> to vector<8x512xf32>
    %5 = vector.broadcast %3 : vector<1x512xf32> to vector<8x512xf32>
    %6 = arith.mulf %4, %5 : vector<8x512xf32>
    %c0_7 = arith.constant 0 : index
    %c0_8 = arith.constant 0 : index
    %7 = vector.load %arg5[%c0_7, %c0_8] : memref<128x512xf32, #tpu.memory_space<vmem>>, vector<128x512xf32>
    %cst = arith.constant dense<0.000000e+00> : vector<8x512xf32>
    %8 = tpu.matmul %1, %7, %cst {dimension_numbers = #tpu.dot_dimension_numbers<[1], [0], [0], [1], [0, 0, 1, 1], [], []>} : vector<8x128xf32>, vector<128x512xf32>, vector<8x512xf32> -> vector<8x512xf32>
    %9 = arith.addf %6, %8 : vector<8x512xf32>
    %c0_9 = arith.constant 0 : index
    %c0_10 = arith.constant 0 : index
    %10 = vector.load %arg6[%c0_9, %c0_10] : memref<1x512xf32, #tpu.memory_space<vmem>>, vector<1x512xf32>
    %11 = vector.broadcast %10 : vector<1x512xf32> to vector<8x512xf32>
    %12 = arith.addf %9, %11 : vector<8x512xf32>
    %13 = vector.extract_strided_slice %12 {offsets = [0, 0], sizes = [8, 128], strides = [1, 1]} : vector<8x512xf32> to vector<8x128xf32>
    %cst_11 = arith.constant 5.000000e-01 : f32
    %14 = vector.broadcast %cst_11 : f32 to vector<8x128xf32>
    %15 = arith.mulf %14, %13 : vector<8x128xf32>
    %16 = math.tanh %15 : vector<8x128xf32>
    %cst_12 = arith.constant 5.000000e-01 : f32
    %17 = vector.broadcast %cst_12 : f32 to vector<8x128xf32>
    %18 = arith.mulf %17, %16 : vector<8x128xf32>
    %cst_13 = arith.constant 5.000000e-01 : f32
    %19 = vector.broadcast %cst_13 : f32 to vector<8x128xf32>
    %20 = arith.addf %18, %19 : vector<8x128xf32>
    %21 = vector.extract_strided_slice %12 {offsets = [0, 128], sizes = [8, 128], strides = [1, 1]} : vector<8x512xf32> to vector<8x128xf32>
    %cst_14 = arith.constant 5.000000e-01 : f32
    %22 = vector.broadcast %cst_14 : f32 to vector<8x128xf32>
    %23 = arith.mulf %22, %21 : vector<8x128xf32>
    %24 = math.tanh %23 : vector<8x128xf32>
    %cst_15 = arith.constant 5.000000e-01 : f32
    %25 = vector.broadcast %cst_15 : f32 to vector<8x128xf32>
    %26 = arith.mulf %25, %24 : vector<8x128xf32>
    %cst_16 = arith.constant 5.000000e-01 : f32
    %27 = vector.broadcast %cst_16 : f32 to vector<8x128xf32>
    %28 = arith.addf %26, %27 : vector<8x128xf32>
    %29 = vector.extract_strided_slice %12 {offsets = [0, 256], sizes = [8, 128], strides = [1, 1]} : vector<8x512xf32> to vector<8x128xf32>
    %30 = math.tanh %29 : vector<8x128xf32>
    %31 = vector.extract_strided_slice %12 {offsets = [0, 384], sizes = [8, 128], strides = [1, 1]} : vector<8x512xf32> to vector<8x128xf32>
    %cst_17 = arith.constant 5.000000e-01 : f32
    %32 = vector.broadcast %cst_17 : f32 to vector<8x128xf32>
    %33 = arith.mulf %32, %31 : vector<8x128xf32>
    %34 = math.tanh %33 : vector<8x128xf32>
    %cst_18 = arith.constant 5.000000e-01 : f32
    %35 = vector.broadcast %cst_18 : f32 to vector<8x128xf32>
    %36 = arith.mulf %35, %34 : vector<8x128xf32>
    %cst_19 = arith.constant 5.000000e-01 : f32
    %37 = vector.broadcast %cst_19 : f32 to vector<8x128xf32>
    %38 = arith.addf %36, %37 : vector<8x128xf32>
    %39 = arith.mulf %28, %2 : vector<8x128xf32>
    %40 = arith.mulf %20, %30 : vector<8x128xf32>
    %41 = arith.addf %39, %40 : vector<8x128xf32>
    %42 = math.tanh %41 : vector<8x128xf32>
    %43 = arith.mulf %38, %42 : vector<8x128xf32>
    %c0_20 = arith.constant 0 : index
    %c0_21 = arith.constant 0 : index
    %44 = vector.load %arg7[%c0_20, %c0_21] : memref<128x128xf32, #tpu.memory_space<vmem>>, vector<128x128xf32>
    %cst_22 = arith.constant dense<0.000000e+00> : vector<8x128xf32>
    %45 = tpu.matmul %41, %44, %cst_22 {dimension_numbers = #tpu.dot_dimension_numbers<[1], [0], [0], [1], [0, 0, 1, 1], [], []>} : vector<8x128xf32>, vector<128x128xf32>, vector<8x128xf32> -> vector<8x128xf32>
    %c0_23 = arith.constant 0 : index
    %c0_24 = arith.constant 0 : index
    %46 = vector.load %arg8[%c0_23, %c0_24] : memref<1x128xf32, #tpu.memory_space<vmem>>, vector<1x128xf32>
    %47 = vector.broadcast %46 : vector<1x128xf32> to vector<8x128xf32>
    %48 = arith.addf %45, %47 : vector<8x128xf32>
    %cst_25 = arith.constant 0.000000e+00 : f32
    %49 = vector.broadcast %cst_25 : f32 to vector<8x128xf32>
    %50 = arith.maximumf %48, %49 : vector<8x128xf32>
    %c0_26 = arith.constant 0 : index
    %c0_27 = arith.constant 0 : index
    %51 = vector.load %arg9[%c0_26, %c0_27] : memref<128x128xf32, #tpu.memory_space<vmem>>, vector<128x128xf32>
    %cst_28 = arith.constant dense<0.000000e+00> : vector<8x128xf32>
    %52 = tpu.matmul %50, %51, %cst_28 {dimension_numbers = #tpu.dot_dimension_numbers<[1], [0], [0], [1], [0, 0, 1, 1], [], []>} : vector<8x128xf32>, vector<128x128xf32>, vector<8x128xf32> -> vector<8x128xf32>
    %c0_29 = arith.constant 0 : index
    %c0_30 = arith.constant 0 : index
    %53 = vector.load %arg10[%c0_29, %c0_30] : memref<1x128xf32, #tpu.memory_space<vmem>>, vector<1x128xf32>
    %54 = vector.broadcast %53 : vector<1x128xf32> to vector<8x128xf32>
    %55 = arith.addf %52, %54 : vector<8x128xf32>
    %cst_31 = arith.constant 0.000000e+00 : f32
    %56 = vector.broadcast %cst_31 : f32 to vector<8x128xf32>
    %57 = arith.maximumf %55, %56 : vector<8x128xf32>
    %58 = math.absf %55 : vector<8x128xf32>
    %cst_32 = arith.constant 0.000000e+00 : f32
    %59 = vector.broadcast %cst_32 : f32 to vector<8x128xf32>
    %60 = arith.subf %59, %58 : vector<8x128xf32>
    %61 = math.exp %60 : vector<8x128xf32>
    %cst_33 = arith.constant 1.000000e+00 : f32
    %62 = vector.broadcast %cst_33 : f32 to vector<8x128xf32>
    %63 = arith.addf %62, %61 : vector<8x128xf32>
    %64 = math.log %63 : vector<8x128xf32>
    %65 = arith.addf %57, %64 : vector<8x128xf32>
    %c0_34 = arith.constant 0 : index
    %c0_35 = arith.constant 0 : index
    %66 = vector.load %arg11[%c0_34, %c0_35] : memref<8x128xf32, #tpu.memory_space<vmem>>, vector<8x128xf32>
    tpu.vector_store %arg11[%c0_34, %c0_35], %65 {strides = array<i32>} : memref<8x128xf32, #tpu.memory_space<vmem>>, vector<8x128xf32>,
    %c0_36 = arith.constant 0 : index
    %c0_37 = arith.constant 0 : index
    %67 = vector.load %arg12[%c0_36, %c0_37] : memref<8x128xf32, #tpu.memory_space<vmem>>, vector<8x128xf32>
    tpu.vector_store %arg12[%c0_36, %c0_37], %43 {strides = array<i32>} : memref<8x128xf32, #tpu.memory_space<vmem>>, vector<8x128xf32>,
    %c0_38 = arith.constant 0 : index
    %c0_39 = arith.constant 0 : index
    %68 = vector.load %arg13[%c0_38, %c0_39] : memref<8x128xf32, #tpu.memory_space<vmem>>, vector<8x128xf32>
    tpu.vector_store %arg13[%c0_38, %c0_39], %41 {strides = array<i32>} : memref<8x128xf32, #tpu.memory_space<vmem>>, vector<8x128xf32>,
    return
  }
  func.func @transform_0(%arg0: i32) -> (i32, i32) {
    %c0_i32 = arith.constant 0 : i32
    %c0_i32_0 = arith.constant 0 : i32
    return %arg0, %c0_i32 : i32, i32
  }
  func.func @transform_1(%arg0: i32) -> (i32, i32) {
    %c0_i32 = arith.constant 0 : i32
    %c0_i32_0 = arith.constant 0 : i32
    return %arg0, %c0_i32 : i32, i32
  }
  func.func @transform_2(%arg0: i32) -> (i32, i32) {
    %c0_i32 = arith.constant 0 : i32
    %c0_i32_0 = arith.constant 0 : i32
    return %arg0, %c0_i32 : i32, i32
  }
  func.func @transform_3(%arg0: i32) -> (i32, i32) {
    %c0_i32 = arith.constant 0 : i32
    %c0_i32_0 = arith.constant 0 : i32
    %c0_i32_1 = arith.constant 0 : i32
    return %c0_i32, %c0_i32_0 : i32, i32
  }
  func.func @transform_4(%arg0: i32) -> (i32, i32) {
    %c0_i32 = arith.constant 0 : i32
    %c0_i32_0 = arith.constant 0 : i32
    %c0_i32_1 = arith.constant 0 : i32
    return %c0_i32, %c0_i32_0 : i32, i32
  }
  func.func @transform_5(%arg0: i32) -> (i32, i32) {
    %c0_i32 = arith.constant 0 : i32
    %c0_i32_0 = arith.constant 0 : i32
    %c0_i32_1 = arith.constant 0 : i32
    return %c0_i32, %c0_i32_0 : i32, i32
  }
  func.func @transform_6(%arg0: i32) -> (i32, i32) {
    %c0_i32 = arith.constant 0 : i32
    %c0_i32_0 = arith.constant 0 : i32
    %c0_i32_1 = arith.constant 0 : i32
    return %c0_i32, %c0_i32_0 : i32, i32
  }
  func.func @transform_7(%arg0: i32) -> (i32, i32) {
    %c0_i32 = arith.constant 0 : i32
    %c0_i32_0 = arith.constant 0 : i32
    %c0_i32_1 = arith.constant 0 : i32
    return %c0_i32, %c0_i32_0 : i32, i32
  }
  func.func @transform_8(%arg0: i32) -> (i32, i32) {
    %c0_i32 = arith.constant 0 : i32
    %c0_i32_0 = arith.constant 0 : i32
    %c0_i32_1 = arith.constant 0 : i32
    return %c0_i32, %c0_i32_0 : i32, i32
  }
  func.func @transform_9(%arg0: i32) -> (i32, i32) {
    %c0_i32 = arith.constant 0 : i32
    %c0_i32_0 = arith.constant 0 : i32
    %c0_i32_1 = arith.constant 0 : i32
    return %c0_i32, %c0_i32_0 : i32, i32
  }
  func.func @transform_10(%arg0: i32) -> (i32, i32) {
    %c0_i32 = arith.constant 0 : i32
    %c0_i32_0 = arith.constant 0 : i32
    return %arg0, %c0_i32 : i32, i32
  }
  func.func @transform_11(%arg0: i32) -> (i32, i32) {
    %c0_i32 = arith.constant 0 : i32
    %c0_i32_0 = arith.constant 0 : i32
    return %arg0, %c0_i32 : i32, i32
  }
  func.func @transform_12(%arg0: i32) -> (i32, i32) {
    %c0_i32 = arith.constant 0 : i32
    %c0_i32_0 = arith.constant 0 : i32
    return %arg0, %c0_i32 : i32, i32
  }
}

</mosaic_0001>

<llo_original>
// kernel: norm_lstmb_forward.1
$region0: #{norm_lstmb_forward.1}
  #allocation0 [shape = 'u32[]', space=smem, size = 0x4, offset = 0x4, fixed_abs, tag = 'smem constant byte address 0x4 - core index']
  #allocation1 [shape = 'u32[144,128]{1,0:T(1,128)}', space=vmem, size = 0x12000, scoped, tag = 'internal scratch']
  %s0 = inlined_call_operand.vmem [shape: f32[16,1], index: 0, kind: input, shape index: {}]
  %s1 = inlined_call_operand.vmem [shape: f32[16,128], index: 1, kind: input, shape index: {}]
  %s2 = inlined_call_operand.vmem [shape: f32[16,128], index: 2, kind: input, shape index: {}]
  %s3 = inlined_call_operand.vmem [shape: f32[1,512], index: 3, kind: input, shape index: {}]
  %s4 = inlined_call_operand.vmem [shape: f32[128,512], index: 4, kind: input, shape index: {}]
  %s5 = inlined_call_operand.vmem [shape: f32[1,512], index: 5, kind: input, shape index: {}]
  %s6 = inlined_call_operand.vmem [shape: f32[128,128], index: 6, kind: input, shape index: {}]
  %s7 = inlined_call_operand.vmem [shape: f32[1,128], index: 7, kind: input, shape index: {}]
  %s8 = inlined_call_operand.vmem [shape: f32[128,128], index: 8, kind: input, shape index: {}]
  %s9 = inlined_call_operand.vmem [shape: f32[1,128], index: 9, kind: input, shape index: {}]
  %s10 = inlined_call_operand.vmem [shape: f32[16,128], index: 10, kind: output, shape index: {0}]
  %s11 = inlined_call_operand.hbm [shape: f32[16,128], index: 11, kind: output, shape index: {1}]
  %s12 = inlined_call_operand.hbm [shape: f32[16,128], index: 12, kind: output, shape index: {2}]
  %13 = xla_tuple %s10, %s11, %s12
  %s14 = sld [smem:[#allocation0]]
  $region89: #{norm_lstmb_forward.1} parent=0
    _
  %s16 = ssub.s32 1, %s14
  %s17 = scalar_select 0, %s16, %s14
  $region1: #{norm_lstmb_forward.1} parent=0
    #allocation2 [shape = 'u8[8192]{0}', space=vmem, size = 0x2000, scoped, tag = 'output window, operand 1']
    #allocation3 [shape = 's32[2]{0}', space=sflag, size = 0x8, scoped, tag = 'scoped memory for norm_lstmb_forward.1']
    #allocation4 [shape = 'u8[8192]{0}', space=vmem, size = 0x2000, scoped, tag = 'output window, operand 2']
    #allocation5 [shape = 's32[2]{0}', space=sflag, size = 0x8, scoped, tag = 'scoped memory for norm_lstmb_forward.1']
    %18 = vsyncpa [#allocation3], 0
    %s19 = scalar_lea.sflag [#allocation3], 1
    %20 = vsyncpa %s19, 0
    %21 = vsyncpa [#allocation5], 0
    %s22 = scalar_lea.sflag [#allocation5], 1
    %23 = vsyncpa %s22, 0
    loop: start=0, step=1, limit=4
    $region2: #{norm_lstmb_forward.1} parent=1 // loop_pre_header
      _
    $region3: #{norm_lstmb_forward.1} parent=1 // loop_header
      %s25 = sphi 0, %s29
      %p26 = scmp.ge.s32.totalorder %s25, 4
      %s35 = sphi 0, %s37
      %s38 = sphi 0, %s35
      %s39 = sphi 0, %s38
      %s55 = sphi 0, %s39
      %s61 = sphi 0, %s63
      %s64 = sphi 0, %s61
      %s65 = sphi 0, %s64
      %s81 = sphi 0, %s65
      %s87 = sphi 0, %s89
      %s90 = sphi 0, %s87
      %s91 = sphi 0, %s90
      %s107 = sphi 0, %s91
      %s111 = sphi 0, %s111
      %s113 = sphi 0, %s111
      %s114 = sphi 0, %s113
      %s128 = sphi 0, %s114
      %s132 = sphi 0, %s132
      %s134 = sphi 0, %s132
      %s135 = sphi 0, %s134
      %s149 = sphi 0, %s135
      %s153 = sphi 0, %s153
      %s155 = sphi 0, %s153
      %s156 = sphi 0, %s155
      %s170 = sphi 0, %s156
      %s174 = sphi 0, %s174
      %s176 = sphi 0, %s174
      %s177 = sphi 0, %s176
      %s191 = sphi 0, %s177
      %s195 = sphi 0, %s195
      %s197 = sphi 0, %s195
      %s198 = sphi 0, %s197
      %s212 = sphi 0, %s198
      %s216 = sphi 0, %s216
      %s218 = sphi 0, %s216
      %s219 = sphi 0, %s218
      %s233 = sphi 0, %s219
      %s237 = sphi 0, %s237
      %s239 = sphi 0, %s237
      %s240 = sphi 0, %s239
      %s254 = sphi 0, %s240
      %s260 = sphi 0, %s262
      %s263 = sphi 0, %s260
      %s264 = sphi 0, %s263
      %s280 = sphi 0, %s264
      %s286 = sphi 0, %s288
      %s289 = sphi 0, %s286
      %s290 = sphi 0, %s289
      %s306 = sphi 0, %s290
      %s312 = sphi 0, %s314
      %s315 = sphi 0, %s312
      %s316 = sphi 0, %s315
      %s332 = sphi 0, %s316
    $region4: #{norm_lstmb_forward.1} parent=1 // loop_header_branch
      %28 = sbr.rel (%p26) target = $region8
    $region5: #{norm_lstmb_forward.1} parent=1 // loop_body
      %s30 = ssub.s32 %s25, 1
      %s31 = ssub.s32 %s25, 2
      %s32 = sadd.s32 %s25, 1
      %s33 = ssub.s32 %s25, %s32
      %p34 = scmp.eq.s32.totalorder %s33, 0
      %s36 = sadd.s32 %s35, 1
      %s37 = scalar_select %p34, %s35, %s36
      %p40 = pneg %p34
      %p41 = scmp.eq.s32.totalorder %s25, 1
      %p42 = por %p40, %p41
      %p43 = scmp.ne.s32.totalorder %s35, %s38
      %p44 = scmp.eq.s32.totalorder %s25, 0
      %p45 = por %p43, %p44
      %p46 = scmp.ne.s32.totalorder %s35, %s38
      %p47 = scmp.eq.s32.totalorder %s30, 1
      %p48 = por %p46, %p47
      %p49 = scmp.ne.s32.totalorder %s38, %s39
      %p50 = scmp.eq.s32.totalorder %s30, 0
      %p51 = por %p49, %p50
      %p52 = scmp.ne.s32.totalorder %s38, %s39
      %p53 = scmp.eq.s32.totalorder %s31, 1
      %p54 = por %p52, %p53
      %p56 = scmp.ne.s32.totalorder %s39, %s55
      %p57 = scmp.eq.s32.totalorder %s31, 0
      %p58 = por %p56, %p57
      %s59 = ssub.s32 %s25, %s32
      %p60 = scmp.eq.s32.totalorder %s59, 0
      %s62 = sadd.s32 %s61, 1
      %s63 = scalar_select %p60, %s61, %s62
      %p66 = pneg %p60
      %p67 = scmp.eq.s32.totalorder %s25, 1
      %p68 = por %p66, %p67
      %p69 = scmp.ne.s32.totalorder %s61, %s64
      %p70 = scmp.eq.s32.totalorder %s25, 0
      %p71 = por %p69, %p70
      %p72 = scmp.ne.s32.totalorder %s61, %s64
      %p73 = scmp.eq.s32.totalorder %s30, 1
      %p74 = por %p72, %p73
      %p75 = scmp.ne.s32.totalorder %s64, %s65
      %p76 = scmp.eq.s32.totalorder %s30, 0
      %p77 = por %p75, %p76
      %p78 = scmp.ne.s32.totalorder %s64, %s65
      %p79 = scmp.eq.s32.totalorder %s31, 1
      %p80 = por %p78, %p79
      %p82 = scmp.ne.s32.totalorder %s65, %s81
      %p83 = scmp.eq.s32.totalorder %s31, 0
      %p84 = por %p82, %p83
      %s85 = ssub.s32 %s25, %s32
      %p86 = scmp.eq.s32.totalorder %s85, 0
      %s88 = sadd.s32 %s87, 1
      %s89 = scalar_select %p86, %s87, %s88
      %p92 = pneg %p86
      %p93 = scmp.eq.s32.totalorder %s25, 1
      %p94 = por %p92, %p93
      %p95 = scmp.ne.s32.totalorder %s87, %s90
      %p96 = scmp.eq.s32.totalorder %s25, 0
      %p97 = por %p95, %p96
      %p98 = scmp.ne.s32.totalorder %s87, %s90
      %p99 = scmp.eq.s32.totalorder %s30, 1
      %p100 = por %p98, %p99
      %p101 = scmp.ne.s32.totalorder %s90, %s91
      %p102 = scmp.eq.s32.totalorder %s30, 0
      %p103 = por %p101, %p102
      %p104 = scmp.ne.s32.totalorder %s90, %s91
      %p105 = scmp.eq.s32.totalorder %s31, 1
      %p106 = por %p104, %p105
      %p108 = scmp.ne.s32.totalorder %s91, %s107
      %p109 = scmp.eq.s32.totalorder %s31, 0
      %p110 = por %p108, %p109
      %s112 = sadd.s32 %s111, 1
      %p115 = scmp.eq.s32.totalorder %s25, 1
      %p116 = scmp.ne.s32.totalorder %s111, %s113
      %p117 = scmp.eq.s32.totalorder %s25, 0
      %p118 = por %p116, %p117
      %p119 = scmp.ne.s32.totalorder %s111, %s113
      %p120 = scmp.eq.s32.totalorder %s30, 1
      %p121 = por %p119, %p120
      %p122 = scmp.ne.s32.totalorder %s113, %s114
      %p123 = scmp.eq.s32.totalorder %s30, 0
      %p124 = por %p122, %p123
      %p125 = scmp.ne.s32.totalorder %s113, %s114
      %p126 = scmp.eq.s32.totalorder %s31, 1
      %p127 = por %p125, %p126
      %p129 = scmp.ne.s32.totalorder %s114, %s128
      %p130 = scmp.eq.s32.totalorder %s31, 0
      %p131 = por %p129, %p130
      %s133 = sadd.s32 %s132, 1
      %p136 = scmp.eq.s32.totalorder %s25, 1
      %p137 = scmp.ne.s32.totalorder %s132, %s134
      %p138 = scmp.eq.s32.totalorder %s25, 0
      %p139 = por %p137, %p138
      %p140 = scmp.ne.s32.totalorder %s132, %s134
      %p141 = scmp.eq.s32.totalorder %s30, 1
      %p142 = por %p140, %p141
      %p143 = scmp.ne.s32.totalorder %s134, %s135
      %p144 = scmp.eq.s32.totalorder %s30, 0
      %p145 = por %p143, %p144
      %p146 = scmp.ne.s32.totalorder %s134, %s135
      %p147 = scmp.eq.s32.totalorder %s31, 1
      %p148 = por %p146, %p147
      %p150 = scmp.ne.s32.totalorder %s135, %s149
      %p151 = scmp.eq.s32.totalorder %s31, 0
      %p152 = por %p150, %p151
      %s154 = sadd.s32 %s153, 1
      %p157 = scmp.eq.s32.totalorder %s25, 1
      %p158 = scmp.ne.s32.totalorder %s153, %s155
      %p159 = scmp.eq.s32.totalorder %s25, 0
      %p160 = por %p158, %p159
      %p161 = scmp.ne.s32.totalorder %s153, %s155
      %p162 = scmp.eq.s32.totalorder %s30, 1
      %p163 = por %p161, %p162
      %p164 = scmp.ne.s32.totalorder %s155, %s156
      %p165 = scmp.eq.s32.totalorder %s30, 0
      %p166 = por %p164, %p165
      %p167 = scmp.ne.s32.totalorder %s155, %s156
      %p168 = scmp.eq.s32.totalorder %s31, 1
      %p169 = por %p167, %p168
      %p171 = scmp.ne.s32.totalorder %s156, %s170
      %p172 = scmp.eq.s32.totalorder %s31, 0
      %p173 = por %p171, %p172
      %s175 = sadd.s32 %s174, 1
      %p178 = scmp.eq.s32.totalorder %s25, 1
      %p179 = scmp.ne.s32.totalorder %s174, %s176
      %p180 = scmp.eq.s32.totalorder %s25, 0
      %p181 = por %p179, %p180
      %p182 = scmp.ne.s32.totalorder %s174, %s176
      %p183 = scmp.eq.s32.totalorder %s30, 1
      %p184 = por %p182, %p183
      %p185 = scmp.ne.s32.totalorder %s176, %s177
      %p186 = scmp.eq.s32.totalorder %s30, 0
      %p187 = por %p185, %p186
      %p188 = scmp.ne.s32.totalorder %s176, %s177
      %p189 = scmp.eq.s32.totalorder %s31, 1
      %p190 = por %p188, %p189
      %p192 = scmp.ne.s32.totalorder %s177, %s191
      %p193 = scmp.eq.s32.totalorder %s31, 0
      %p194 = por %p192, %p193
      %s196 = sadd.s32 %s195, 1
      %p199 = scmp.eq.s32.totalorder %s25, 1
      %p200 = scmp.ne.s32.totalorder %s195, %s197
      %p201 = scmp.eq.s32.totalorder %s25, 0
      %p202 = por %p200, %p201
      %p203 = scmp.ne.s32.totalorder %s195, %s197
      %p204 = scmp.eq.s32.totalorder %s30, 1
      %p205 = por %p203, %p204
      %p206 = scmp.ne.s32.totalorder %s197, %s198
      %p207 = scmp.eq.s32.totalorder %s30, 0
      %p208 = por %p206, %p207
      %p209 = scmp.ne.s32.totalorder %s197, %s198
      %p210 = scmp.eq.s32.totalorder %s31, 1
      %p211 = por %p209, %p210
      %p213 = scmp.ne.s32.totalorder %s198, %s212
      %p214 = scmp.eq.s32.totalorder %s31, 0
      %p215 = por %p213, %p214
      %s217 = sadd.s32 %s216, 1
      %p220 = scmp.eq.s32.totalorder %s25, 1
      %p221 = scmp.ne.s32.totalorder %s216, %s218
      %p222 = scmp.eq.s32.totalorder %s25, 0
      %p223 = por %p221, %p222
      %p224 = scmp.ne.s32.totalorder %s216, %s218
      %p225 = scmp.eq.s32.totalorder %s30, 1
      %p226 = por %p224, %p225
      %p227 = scmp.ne.s32.totalorder %s218, %s219
      %p228 = scmp.eq.s32.totalorder %s30, 0
      %p229 = por %p227, %p228
      %p230 = scmp.ne.s32.totalorder %s218, %s219
      %p231 = scmp.eq.s32.totalorder %s31, 1
      %p232 = por %p230, %p231
      %p234 = scmp.ne.s32.totalorder %s219, %s233
      %p235 = scmp.eq.s32.totalorder %s31, 0
      %p236 = por %p234, %p235
      %s238 = sadd.s32 %s237, 1
      %p241 = scmp.eq.s32.totalorder %s25, 1
      %p242 = scmp.ne.s32.totalorder %s237, %s239
      %p243 = scmp.eq.s32.totalorder %s25, 0
      %p244 = por %p242, %p243
      %p245 = scmp.ne.s32.totalorder %s237, %s239
      %p246 = scmp.eq.s32.totalorder %s30, 1
      %p247 = por %p245, %p246
      %p248 = scmp.ne.s32.totalorder %s239, %s240
      %p249 = scmp.eq.s32.totalorder %s30, 0
      %p250 = por %p248, %p249
      %p251 = scmp.ne.s32.totalorder %s239, %s240
      %p252 = scmp.eq.s32.totalorder %s31, 1
      %p253 = por %p251, %p252
      %p255 = scmp.ne.s32.totalorder %s240, %s254
      %p256 = scmp.eq.s32.totalorder %s31, 0
      %p257 = por %p255, %p256
      %s258 = ssub.s32 %s25, %s32
      %p259 = scmp.eq.s32.totalorder %s258, 0
      %s261 = sadd.s32 %s260, 1
      %s262 = scalar_select %p259, %s260, %s261
      %p265 = pneg %p259
      %p266 = scmp.eq.s32.totalorder %s25, 1
      %p267 = por %p265, %p266
      %p268 = scmp.ne.s32.totalorder %s260, %s263
      %p269 = scmp.eq.s32.totalorder %s25, 0
      %p270 = por %p268, %p269
      %p271 = scmp.ne.s32.totalorder %s260, %s263
      %p272 = scmp.eq.s32.totalorder %s30, 1
      %p273 = por %p271, %p272
      %p274 = scmp.ne.s32.totalorder %s263, %s264
      %p275 = scmp.eq.s32.totalorder %s30, 0
      %p276 = por %p274, %p275
      %p277 = scmp.ne.s32.totalorder %s263, %s264
      %p278 = scmp.eq.s32.totalorder %s31, 1
      %p279 = por %p277, %p278
      %p281 = scmp.ne.s32.totalorder %s264, %s280
      %p282 = scmp.eq.s32.totalorder %s31, 0
      %p283 = por %p281, %p282
      %s284 = ssub.s32 %s25, %s32
      %p285 = scmp.eq.s32.totalorder %s284, 0
      %s287 = sadd.s32 %s286, 1
      %s288 = scalar_select %p285, %s286, %s287
      %p291 = pneg %p285
      %p292 = scmp.eq.s32.totalorder %s25, 1
      %p293 = por %p291, %p292
      %p294 = scmp.ne.s32.totalorder %s286, %s289
      %p295 = scmp.eq.s32.totalorder %s25, 0
      %p296 = por %p294, %p295
      %p297 = scmp.ne.s32.totalorder %s286, %s289
      %p298 = scmp.eq.s32.totalorder %s30, 1
      %p299 = por %p297, %p298
      %p300 = scmp.ne.s32.totalorder %s289, %s290
      %p301 = scmp.eq.s32.totalorder %s30, 0
      %p302 = por %p300, %p301
      %p303 = scmp.ne.s32.totalorder %s289, %s290
      %p304 = scmp.eq.s32.totalorder %s31, 1
      %p305 = por %p303, %p304
      %p307 = scmp.ne.s32.totalorder %s290, %s306
      %p308 = scmp.eq.s32.totalorder %s31, 0
      %p309 = por %p307, %p308
      %s310 = ssub.s32 %s25, %s32
      %p311 = scmp.eq.s32.totalorder %s310, 0
      %s313 = sadd.s32 %s312, 1
      %s314 = scalar_select %p311, %s312, %s313
      %p317 = pneg %p311
      %p318 = scmp.eq.s32.totalorder %s25, 1
      %p319 = por %p317, %p318
      %p320 = scmp.ne.s32.totalorder %s312, %s315
      %p321 = scmp.eq.s32.totalorder %s25, 0
      %p322 = por %p320, %p321
      %p323 = scmp.ne.s32.totalorder %s312, %s315
      %p324 = scmp.eq.s32.totalorder %s30, 1
      %p325 = por %p323, %p324
      %p326 = scmp.ne.s32.totalorder %s315, %s316
      %p327 = scmp.eq.s32.totalorder %s30, 0
      %p328 = por %p326, %p327
      %p329 = scmp.ne.s32.totalorder %s315, %s316
      %p330 = scmp.eq.s32.totalorder %s31, 1
      %p331 = por %p329, %p330
      %p333 = scmp.ne.s32.totalorder %s316, %s332
      %p334 = scmp.eq.s32.totalorder %s31, 0
      %p335 = por %p333, %p334
      %p336 = scmp.le.s32.totalorder 1, %s25
      %p337 = scmp.lt.s32.totalorder %s25, 3
      %p338 = pnand %p336, %p337
      %p339 = pneg %p338
      // Predicated region
      $region9: #{norm_lstmb_forward.1} parent=5 // pred_check
        _
      $region10: #{norm_lstmb_forward.1} parent=5 // pred_check_branch
        %341 = sbr.rel (%p338) target = $region12
      $region11: #{norm_lstmb_forward.1} parent=5 // pred_region
        %s342 = ssub.s32 %s25, 1
        // Predicated region
        $region13: #{norm_lstmb_forward.1} parent=11 // pred_check
          %p343 = pneg %p124
        $region14: #{norm_lstmb_forward.1} parent=11 // pred_check_branch
          %345 = sbr.rel (%p343) target = $region16
        $region15: #{norm_lstmb_forward.1} parent=11 // pred_region
          _
        $region16: #{norm_lstmb_forward.1} parent=11 // pred_fallthru
          _
        // Predicated region
        $region17: #{norm_lstmb_forward.1} parent=11 // pred_check
          %p346 = pneg %p145
        $region18: #{norm_lstmb_forward.1} parent=11 // pred_check_branch
          %348 = sbr.rel (%p346) target = $region20
        $region19: #{norm_lstmb_forward.1} parent=11 // pred_region
          _
        $region20: #{norm_lstmb_forward.1} parent=11 // pred_fallthru
          _
        // Predicated region
        $region21: #{norm_lstmb_forward.1} parent=11 // pred_check
          %p349 = pneg %p166
        $region22: #{norm_lstmb_forward.1} parent=11 // pred_check_branch
          %351 = sbr.rel (%p349) target = $region24
        $region23: #{norm_lstmb_forward.1} parent=11 // pred_region
          _
        $region24: #{norm_lstmb_forward.1} parent=11 // pred_fallthru
          _
        // Predicated region
        $region25: #{norm_lstmb_forward.1} parent=11 // pred_check
          %p352 = pneg %p187
        $region26: #{norm_lstmb_forward.1} parent=11 // pred_check_branch
          %354 = sbr.rel (%p352) target = $region28
        $region27: #{norm_lstmb_forward.1} parent=11 // pred_region
          _
        $region28: #{norm_lstmb_forward.1} parent=11 // pred_fallthru
          _
        // Predicated region
        $region29: #{norm_lstmb_forward.1} parent=11 // pred_check
          %p355 = pneg %p208
        $region30: #{norm_lstmb_forward.1} parent=11 // pred_check_branch
          %357 = sbr.rel (%p355) target = $region32
        $region31: #{norm_lstmb_forward.1} parent=11 // pred_region
          _
        $region32: #{norm_lstmb_forward.1} parent=11 // pred_fallthru
          _
        // Predicated region
        $region33: #{norm_lstmb_forward.1} parent=11 // pred_check
          %p358 = pneg %p229
        $region34: #{norm_lstmb_forward.1} parent=11 // pred_check_branch
          %360 = sbr.rel (%p358) target = $region36
        $region35: #{norm_lstmb_forward.1} parent=11 // pred_region
          _
        $region36: #{norm_lstmb_forward.1} parent=11 // pred_fallthru
          _
        // Predicated region
        $region37: #{norm_lstmb_forward.1} parent=11 // pred_check
          %p361 = pneg %p250
        $region38: #{norm_lstmb_forward.1} parent=11 // pred_check_branch
          %363 = sbr.rel (%p361) target = $region40
        $region39: #{norm_lstmb_forward.1} parent=11 // pred_region
          _
        $region40: #{norm_lstmb_forward.1} parent=11 // pred_fallthru
          _
      $region12: #{norm_lstmb_forward.1} parent=5 // pred_fallthru
        _
      %p364 = scmp.lt.s32.totalorder %s25, 2
      // Predicated region
      $region41: #{norm_lstmb_forward.1} parent=5 // pred_check
        %p365 = pneg %p364
      $region42: #{norm_lstmb_forward.1} parent=5 // pred_check_branch
        %367 = sbr.rel (%p365) target = $region44
      $region43: #{norm_lstmb_forward.1} parent=5 // pred_region
        // Predicated region
        $region45: #{norm_lstmb_forward.1} parent=43 // pred_check
          %p368 = pneg %p45
        $region46: #{norm_lstmb_forward.1} parent=43 // pred_check_branch
          %370 = sbr.rel (%p368) target = $region48
        $region47: #{norm_lstmb_forward.1} parent=43 // pred_region
          %p371 = scmp.lt.s32.totalorder %s25, 1
          %s372 = scalar_select %p371, %s25, 1
          %s373 = smul.addr %s372, 8
          %s374 = scalar_lea.vmem %s0, %s373
        $region48: #{norm_lstmb_forward.1} parent=43 // pred_fallthru
          _
        // Predicated region
        $region49: #{norm_lstmb_forward.1} parent=43 // pred_check
          %p375 = pneg %p71
        $region50: #{norm_lstmb_forward.1} parent=43 // pred_check_branch
          %377 = sbr.rel (%p375) target = $region52
        $region51: #{norm_lstmb_forward.1} parent=43 // pred_region
          %p378 = scmp.lt.s32.totalorder %s25, 1
          %s379 = scalar_select %p378, %s25, 1
          %s380 = smul.addr %s379, 8
          %s381 = scalar_lea.vmem %s1, %s380
        $region52: #{norm_lstmb_forward.1} parent=43 // pred_fallthru
          _
        // Predicated region
        $region53: #{norm_lstmb_forward.1} parent=43 // pred_check
          %p382 = pneg %p97
        $region54: #{norm_lstmb_forward.1} parent=43 // pred_check_branch
          %384 = sbr.rel (%p382) target = $region56
        $region55: #{norm_lstmb_forward.1} parent=43 // pred_region
          %p385 = scmp.lt.s32.totalorder %s25, 1
          %s386 = scalar_select %p385, %s25, 1
          %s387 = smul.addr %s386, 8
          %s388 = scalar_lea.vmem %s2, %s387
        $region56: #{norm_lstmb_forward.1} parent=43 // pred_fallthru
          _
      $region44: #{norm_lstmb_forward.1} parent=5 // pred_fallthru
        _
      %p389 = scmp.le.s32.totalorder 1, %s25
      %p390 = scmp.lt.s32.totalorder %s25, 3
      %p391 = pnand %p389, %p390
      %p392 = pneg %p391
      // Predicated region
      $region57: #{norm_lstmb_forward.1} parent=5 // pred_check
        _
      $region58: #{norm_lstmb_forward.1} parent=5 // pred_check_branch
        %394 = sbr.rel (%p391) target = $region60
      $region59: #{norm_lstmb_forward.1} parent=5 // pred_region
        %s395 = ssub.s32 %s25, 1
        %p396 = scmp.lt.s32.totalorder %s30, 1
        %s397 = scalar_select %p396, %s30, 1
        %s398 = smul.addr %s397, 8
        %s399 = scalar_lea.vmem %s0, %s398
        %p400 = pneg %p51
        %p401 = pneg %p48
        %p402 = scmp.lt.s32.totalorder %s30, 1
        %s403 = scalar_select %p402, %s30, 1
        %s404 = smul.addr %s403, 8
        %s405 = scalar_lea.vmem %s1, %s404
        %p406 = pneg %p77
        %p407 = pneg %p74
        %p408 = scmp.lt.s32.totalorder %s30, 1
        %s409 = scalar_select %p408, %s30, 1
        %s410 = smul.addr %s409, 8
        %s411 = scalar_lea.vmem %s2, %s410
        %p412 = pneg %p103
        %p413 = pneg %p100
        %p414 = pneg %p124
        %p415 = pneg %p121
        %p416 = pneg %p145
        %p417 = pneg %p142
        %p418 = pneg %p166
        %p419 = pneg %p163
        %p420 = pneg %p187
        %p421 = pneg %p184
        %p422 = pneg %p208
        %p423 = pneg %p205
        %p424 = pneg %p229
        %p425 = pneg %p226
        %p426 = pneg %p250
        %p427 = pneg %p247
        %p428 = pneg %p276
        %p429 = pneg %p273
        %p430 = scmp.lt.s32.totalorder %s30, 1
        %s431 = scalar_select %p430, %s30, 1
        %s432 = smul.addr %s431, 8
        %s433 = scalar_lea.vmem %s10, %s432
        %p434 = pneg %p302
        %p435 = pneg %p299
        %s436 = sand.u32 %s289, 1
        %s437 = scalar_lea.sflag [#allocation3], %s436
        %s438 = sand.u32 %s289, 1
        %s439 = smul.addr %s438, 8
        %s440 = scalar_lea.vmem [#allocation2], %s439
        %p441 = pneg %p328
        %p442 = pneg %p325
        %s443 = sand.u32 %s315, 1
        %s444 = scalar_lea.sflag [#allocation5], %s443
        %s445 = sand.u32 %s315, 1
        %s446 = smul.addr %s445, 8
        %s447 = scalar_lea.vmem [#allocation4], %s446
        %p448 = scmp.lt.s32.totalorder %s30, 1
        %s449 = scalar_select %p448, %s30, 1
        %s450 = smul.addr %s449, 8
        %s451 = scalar_lea.vmem %s0, %s450
        %p452 = scmp.lt.s32.totalorder %s30, 1
        %s453 = scalar_select %p452, %s30, 1
        %s454 = smul.addr %s453, 8
        %s455 = scalar_lea.vmem %s1, %s454
        %p456 = scmp.lt.s32.totalorder %s30, 1
        %s457 = scalar_select %p456, %s30, 1
        %s458 = smul.addr %s457, 8
        %s459 = scalar_lea.vmem %s2, %s458
        %p460 = scmp.lt.s32.totalorder %s30, 1
        %s461 = scalar_select %p460, %s30, 1
        %s462 = smul.addr %s461, 8
        %s463 = scalar_lea.vmem %s10, %s462
        %v464 = vld [vmem:[%s451] sm:$0xff]
        %v465 = vld [vmem:[%s455] sm:$0xff]
        %v466 = vld [vmem:[%s459] sm:$0xff]
        %v467 = vld [vmem:[%s3] sm:$0xf]
        %469 = vset.pattern.permute.xlu0 0
        %470 = vperm.xlu0 %469, %v464
        %v471 = vpop.permute.xlu0 %470
        %v474 = vlaneseq
        %v475 = vshrl.u32 %v474, 7
        %v476 = vsub.s32 0, %v475
        %v477 = vrot.slane %v467, %v476
        %v478 = vlaneseq
        %v479 = vshrl.u32 %v478, 7
        %v480 = vsub.s32 1, %v479
        %v481 = vrot.slane %v467, %v480
        %v482 = vlaneseq
        %v483 = vshrl.u32 %v482, 7
        %v484 = vsub.s32 2, %v483
        %v485 = vrot.slane %v467, %v484
        %v486 = vlaneseq
        %v487 = vshrl.u32 %v486, 7
        %v488 = vsub.s32 3, %v487
        %v489 = vrot.slane %v467, %v488
        %v494 = vmul.f32 %v471, %v477
        %v495 = vmul.f32 %v471, %v481
        %v496 = vmul.f32 %v471, %v485
        %v497 = vmul.f32 %v471, %v489
        %v498 = vld [vmem:[%s4] sm:$0xff]
        %v499 = vld [vmem:[%s4 + $0x8] sm:$0xff]
        %v500 = vld [vmem:[%s4 + $0x10] sm:$0xff]
        %v501 = vld [vmem:[%s4 + $0x18] sm:$0xff]
        %v502 = vld [vmem:[%s4 + $0x20] sm:$0xff]
        %v503 = vld [vmem:[%s4 + $0x28] sm:$0xff]
        %v504 = vld [vmem:[%s4 + $0x30] sm:$0xff]
        %v505 = vld [vmem:[%s4 + $0x38] sm:$0xff]
        %v506 = vld [vmem:[%s4 + $0x40] sm:$0xff]
        %v507 = vld [vmem:[%s4 + $0x48] sm:$0xff]
        %v508 = vld [vmem:[%s4 + $0x50] sm:$0xff]
        %v509 = vld [vmem:[%s4 + $0x58] sm:$0xff]
        %v510 = vld [vmem:[%s4 + $0x60] sm:$0xff]
        %v511 = vld [vmem:[%s4 + $0x68] sm:$0xff]
        %v512 = vld [vmem:[%s4 + $0x70] sm:$0xff]
        %v513 = vld [vmem:[%s4 + $0x78] sm:$0xff]
        %v514 = vld [vmem:[%s4 + $0x80] sm:$0xff]
        %v515 = vld [vmem:[%s4 + $0x88] sm:$0xff]
        %v516 = vld [vmem:[%s4 + $0x90] sm:$0xff]
        %v517 = vld [vmem:[%s4 + $0x98] sm:$0xff]
        %v518 = vld [vmem:[%s4 + $0xa0] sm:$0xff]
        %v519 = vld [vmem:[%s4 + $0xa8] sm:$0xff]
        %v520 = vld [vmem:[%s4 + $0xb0] sm:$0xff]
        %v521 = vld [vmem:[%s4 + $0xb8] sm:$0xff]
        %v522 = vld [vmem:[%s4 + $0xc0] sm:$0xff]
        %v523 = vld [vmem:[%s4 + $0xc8] sm:$0xff]
        %v524 = vld [vmem:[%s4 + $0xd0] sm:$0xff]
        %v525 = vld [vmem:[%s4 + $0xd8] sm:$0xff]
        %v526 = vld [vmem:[%s4 + $0xe0] sm:$0xff]
        %v527 = vld [vmem:[%s4 + $0xe8] sm:$0xff]
        %v528 = vld [vmem:[%s4 + $0xf0] sm:$0xff]
        %v529 = vld [vmem:[%s4 + $0xf8] sm:$0xff]
        %v530 = vld [vmem:[%s4 + $0x100] sm:$0xff]
        %v531 = vld [vmem:[%s4 + $0x108] sm:$0xff]
        %v532 = vld [vmem:[%s4 + $0x110] sm:$0xff]
        %v533 = vld [vmem:[%s4 + $0x118] sm:$0xff]
        %v534 = vld [vmem:[%s4 + $0x120] sm:$0xff]
        %v535 = vld [vmem:[%s4 + $0x128] sm:$0xff]
        %v536 = vld [vmem:[%s4 + $0x130] sm:$0xff]
        %v537 = vld [vmem:[%s4 + $0x138] sm:$0xff]
        %v538 = vld [vmem:[%s4 + $0x140] sm:$0xff]
        %v539 = vld [vmem:[%s4 + $0x148] sm:$0xff]
        %v540 = vld [vmem:[%s4 + $0x150] sm:$0xff]
        %v541 = vld [vmem:[%s4 + $0x158] sm:$0xff]
        %v542 = vld [vmem:[%s4 + $0x160] sm:$0xff]
        %v543 = vld [vmem:[%s4 + $0x168] sm:$0xff]
        %v544 = vld [vmem:[%s4 + $0x170] sm:$0xff]
        %v545 = vld [vmem:[%s4 + $0x178] sm:$0xff]
        %v546 = vld [vmem:[%s4 + $0x180] sm:$0xff]
        %v547 = vld [vmem:[%s4 + $0x188] sm:$0xff]
        %v548 = vld [vmem:[%s4 + $0x190] sm:$0xff]
        %v549 = vld [vmem:[%s4 + $0x198] sm:$0xff]
        %v550 = vld [vmem:[%s4 + $0x1a0] sm:$0xff]
        %v551 = vld [vmem:[%s4 + $0x1a8] sm:$0xff]
        %v552 = vld [vmem:[%s4 + $0x1b0] sm:$0xff]
        %v553 = vld [vmem:[%s4 + $0x1b8] sm:$0xff]
        %v554 = vld [vmem:[%s4 + $0x1c0] sm:$0xff]
        %v555 = vld [vmem:[%s4 + $0x1c8] sm:$0xff]
        %v556 = vld [vmem:[%s4 + $0x1d0] sm:$0xff]
        %v557 = vld [vmem:[%s4 + $0x1d8] sm:$0xff]
        %v558 = vld [vmem:[%s4 + $0x1e0] sm:$0xff]
        %v559 = vld [vmem:[%s4 + $0x1e8] sm:$0xff]
        %v560 = vld [vmem:[%s4 + $0x1f0] sm:$0xff]
        %v561 = vld [vmem:[%s4 + $0x1f8] sm:$0xff]
        %562 = vmatprep.subr.mxu0 %v499
        %563 = vmatpush1.msra.mxu0 %v498
        %564 = vmatprep.subr.mxu0 %v503
        %565 = vmatpush1.msra.mxu0 %v502
        %566 = vmatprep.subr.mxu0 %v507
        %567 = vmatpush1.msra.mxu0 %v506
        %568 = vmatprep.subr.mxu0 %v511
        %569 = vmatpush1.msra.mxu0 %v510
        %570 = vmatprep.subr.mxu0 %v515
        %571 = vmatpush1.msra.mxu0 %v514
        %572 = vmatprep.subr.mxu0 %v519
        %573 = vmatpush1.msra.mxu0 %v518
        %574 = vmatprep.subr.mxu0 %v523
        %575 = vmatpush1.msra.mxu0 %v522
        %576 = vmatprep.subr.mxu0 %v527
        %577 = vmatpush1.msra.mxu0 %v526
        %578 = vmatprep.subr.mxu0 %v531
        %579 = vmatpush1.msra.mxu0 %v530
        %580 = vmatprep.subr.mxu0 %v535
        %581 = vmatpush1.msra.mxu0 %v534
        %582 = vmatprep.subr.mxu0 %v539
        %583 = vmatpush1.msra.mxu0 %v538
        %584 = vmatprep.subr.mxu0 %v543
        %585 = vmatpush1.msra.mxu0 %v542
        %586 = vmatprep.subr.mxu0 %v547
        %587 = vmatpush1.msra.mxu0 %v546
        %588 = vmatprep.subr.mxu0 %v551
        %589 = vmatpush1.msra.mxu0 %v550
        %590 = vmatprep.subr.mxu0 %v555
        %591 = vmatpush1.msra.mxu0 %v554
        %592 = vmatprep.subr.mxu0 %v559
        %593 = vmatpush1.msra.mxu0 %v558
        %594 = vmatprep.subr.mxu0 0.0
        %595 = vmatpush1.msra.mxu0 0.0
        %596 = vmatprep.subr.mxu0 0.0
        %597 = vmatpush1.msra.mxu0 0.0
        %598 = vmatprep.subr.mxu0 0.0
        %599 = vmatpush1.msra.mxu0 0.0
        %600 = vmatprep.subr.mxu0 0.0
        %601 = vmatpush1.msra.mxu0 0.0
        %602 = vmatprep.subr.mxu0 0.0
        %603 = vmatpush1.msra.mxu0 0.0
        %604 = vmatprep.subr.mxu0 0.0
        %605 = vmatpush1.msra.mxu0 0.0
        %606 = vmatprep.subr.mxu0 0.0
        %607 = vmatpush1.msra.mxu0 0.0
        %608 = vmatprep.subr.mxu0 0.0
        %609 = vmatpush1.msra.mxu0 0.0
        %610 = vmatprep.subr.mxu0 0.0
        %611 = vmatpush1.msra.mxu0 0.0
        %612 = vmatprep.subr.mxu0 0.0
        %613 = vmatpush1.msra.mxu0 0.0
        %614 = vmatprep.subr.mxu0 0.0
        %615 = vmatpush1.msra.mxu0 0.0
        %616 = vmatprep.subr.mxu0 0.0
        %617 = vmatpush1.msra.mxu0 0.0
        %618 = vmatprep.subr.mxu0 0.0
        %619 = vmatpush1.msra.mxu0 0.0
        %620 = vmatprep.subr.mxu0 0.0
        %621 = vmatpush1.msra.mxu0 0.0
        %622 = vmatprep.subr.mxu0 0.0
        %623 = vmatpush1.msra.mxu0 0.0
        %624 = vmatprep.subr.mxu0 0.0
        %625 = vmatpush1.msra.mxu0 0.0
        %626 = vmatprep.mubr.f32.mxu0 0.0
        %627 = vmatmul.mubr.f32.gmra.mrb[0].mxu0 %v465
        %v628 = vpop.f32.mrb[0].mxu0
        %v629 = vadd.f32 0.0, %v628
        %v630 = vpop.f32.mrb[0].mxu0
        %v631 = vadd.f32 0.0, %v630
        %632 = vdwg.mxu0
        %633 = vmatprep.subr.mxu0 %v501
        %634 = vmatpush1.msra.mxu0 %v500
        %635 = vmatprep.subr.mxu0 %v505
        %636 = vmatpush1.msra.mxu0 %v504
        %637 = vmatprep.subr.mxu0 %v509
        %638 = vmatpush1.msra.mxu0 %v508
        %639 = vmatprep.subr.mxu0 %v513
        %640 = vmatpush1.msra.mxu0 %v512
        %641 = vmatprep.subr.mxu0 %v517
        %642 = vmatpush1.msra.mxu0 %v516
        %643 = vmatprep.subr.mxu0 %v521
        %644 = vmatpush1.msra.mxu0 %v520
        %645 = vmatprep.subr.mxu0 %v525
        %646 = vmatpush1.msra.mxu0 %v524
        %647 = vmatprep.subr.mxu0 %v529
        %648 = vmatpush1.msra.mxu0 %v528
        %649 = vmatprep.subr.mxu0 %v533
        %650 = vmatpush1.msra.mxu0 %v532
        %651 = vmatprep.subr.mxu0 %v537
        %652 = vmatpush1.msra.mxu0 %v536
        %653 = vmatprep.subr.mxu0 %v541
        %654 = vmatpush1.msra.mxu0 %v540
        %655 = vmatprep.subr.mxu0 %v545
        %656 = vmatpush1.msra.mxu0 %v544
        %657 = vmatprep.subr.mxu0 %v549
        %658 = vmatpush1.msra.mxu0 %v548
        %659 = vmatprep.subr.mxu0 %v553
        %660 = vmatpush1.msra.mxu0 %v552
        %661 = vmatprep.subr.mxu0 %v557
        %662 = vmatpush1.msra.mxu0 %v556
        %663 = vmatprep.subr.mxu0 %v561
        %664 = vmatpush1.msra.mxu0 %v560
        %665 = vmatprep.subr.mxu0 0.0
        %666 = vmatpush1.msra.mxu0 0.0
        %667 = vmatprep.subr.mxu0 0.0
        %668 = vmatpush1.msra.mxu0 0.0
        %669 = vmatprep.subr.mxu0 0.0
        %670 = vmatpush1.msra.mxu0 0.0
        %671 = vmatprep.subr.mxu0 0.0
        %672 = vmatpush1.msra.mxu0 0.0
        %673 = vmatprep.subr.mxu0 0.0
        %674 = vmatpush1.msra.mxu0 0.0
        %675 = vmatprep.subr.mxu0 0.0
        %676 = vmatpush1.msra.mxu0 0.0
        %677 = vmatprep.subr.mxu0 0.0
        %678 = vmatpush1.msra.mxu0 0.0
        %679 = vmatprep.subr.mxu0 0.0
        %680 = vmatpush1.msra.mxu0 0.0
        %681 = vmatprep.subr.mxu0 0.0
        %682 = vmatpush1.msra.mxu0 0.0
        %683 = vmatprep.subr.mxu0 0.0
        %684 = vmatpush1.msra.mxu0 0.0
        %685 = vmatprep.subr.mxu0 0.0
        %686 = vmatpush1.msra.mxu0 0.0
        %687 = vmatprep.subr.mxu0 0.0
        %688 = vmatpush1.msra.mxu0 0.0
        %689 = vmatprep.subr.mxu0 0.0
        %690 = vmatpush1.msra.mxu0 0.0
        %691 = vmatprep.subr.mxu0 0.0
        %692 = vmatpush1.msra.mxu0 0.0
        %693 = vmatprep.subr.mxu0 0.0
        %694 = vmatpush1.msra.mxu0 0.0
        %695 = vmatprep.subr.mxu0 0.0
        %696 = vmatpush1.msra.mxu0 0.0
        %697 = vmatprep.mubr.f32.mxu0 0.0
        %698 = vmatmul.mubr.f32.gmra.mrb[0].mxu0 %v465
        %v699 = vpop.f32.mrb[0].mxu0
        %v700 = vadd.f32 0.0, %v699
        %v701 = vpop.f32.mrb[0].mxu0
        %v702 = vadd.f32 0.0, %v701
        %703 = vdwg.mxu0
        %v704 = vadd.f32 %v494, %v629
        %v705 = vadd.f32 %v495, %v631
        %v706 = vadd.f32 %v496, %v700
        %v707 = vadd.f32 %v497, %v702
        %v708 = vld [vmem:[%s5] sm:$0xf]
        %v710 = vlaneseq
        %v711 = vshrl.u32 %v710, 7
        %v712 = vsub.s32 0, %v711
        %v713 = vrot.slane %v708, %v712
        %v714 = vlaneseq
        %v715 = vshrl.u32 %v714, 7
        %v716 = vsub.s32 1, %v715
        %v717 = vrot.slane %v708, %v716
        %v718 = vlaneseq
        %v719 = vshrl.u32 %v718, 7
        %v720 = vsub.s32 2, %v719
        %v721 = vrot.slane %v708, %v720
        %v722 = vlaneseq
        %v723 = vshrl.u32 %v722, 7
        %v724 = vsub.s32 3, %v723
        %v725 = vrot.slane %v708, %v724
        %v730 = vadd.f32 %v704, %v713
        %v731 = vadd.f32 %v705, %v717
        %v732 = vadd.f32 %v706, %v721
        %v733 = vadd.f32 %v707, %v725
        %v734 = vmul.f32 %v730, 0.5
        %v735 = vtanh.pop %v734
        %v736 = vmul.f32 %v735, 0.5
        %v737 = vadd.f32 %v736, 0.5
        %v738 = vmul.f32 %v731, 0.5
        %v739 = vtanh.pop %v738
        %v740 = vmul.f32 %v739, 0.5
        %v741 = vadd.f32 %v740, 0.5
        %v742 = vtanh.pop %v732
        %v743 = vmul.f32 %v733, 0.5
        %v744 = vtanh.pop %v743
        %v745 = vmul.f32 %v744, 0.5
        %v746 = vadd.f32 %v745, 0.5
        %v747 = vmul.f32 %v741, %v466
        %v748 = vmul.f32 %v737, %v742
        %v749 = vadd.f32 %v747, %v748
        %v750 = vtanh.pop %v749
        %v751 = vmul.f32 %v746, %v750
        %v752 = vld [vmem:[%s6] sm:$0xff]
        %v753 = vld [vmem:[%s6 + $0x8] sm:$0xff]
        %v754 = vld [vmem:[%s6 + $0x10] sm:$0xff]
        %v755 = vld [vmem:[%s6 + $0x18] sm:$0xff]
        %v756 = vld [vmem:[%s6 + $0x20] sm:$0xff]
        %v757 = vld [vmem:[%s6 + $0x28] sm:$0xff]
        %v758 = vld [vmem:[%s6 + $0x30] sm:$0xff]
        %v759 = vld [vmem:[%s6 + $0x38] sm:$0xff]
        %v760 = vld [vmem:[%s6 + $0x40] sm:$0xff]
        %v761 = vld [vmem:[%s6 + $0x48] sm:$0xff]
        %v762 = vld [vmem:[%s6 + $0x50] sm:$0xff]
        %v763 = vld [vmem:[%s6 + $0x58] sm:$0xff]
        %v764 = vld [vmem:[%s6 + $0x60] sm:$0xff]
        %v765 = vld [vmem:[%s6 + $0x68] sm:$0xff]
        %v766 = vld [vmem:[%s6 + $0x70] sm:$0xff]
        %v767 = vld [vmem:[%s6 + $0x78] sm:$0xff]
        %v768 = vld [vmem:[%s7] sm:$0x1]
        %v770 = vlaneseq
        %v771 = vshrl.u32 %v770, 7
        %v772 = vsub.s32 0, %v771
        %v773 = vrot.slane %v768, %v772
        %775 = vmatprep.subr.mxu0 0.0
        %776 = vmatpush1.msra.mxu0 %v752
        %777 = vmatprep.subr.mxu0 0.0
        %778 = vmatpush1.msra.mxu0 %v753
        %779 = vmatprep.subr.mxu0 0.0
        %780 = vmatpush1.msra.mxu0 %v754
        %781 = vmatprep.subr.mxu0 0.0
        %782 = vmatpush1.msra.mxu0 %v755
        %783 = vmatprep.subr.mxu0 0.0
        %784 = vmatpush1.msra.mxu0 %v756
        %785 = vmatprep.subr.mxu0 0.0
        %786 = vmatpush1.msra.mxu0 %v757
        %787 = vmatprep.subr.mxu0 0.0
        %788 = vmatpush1.msra.mxu0 %v758
        %789 = vmatprep.subr.mxu0 0.0
        %790 = vmatpush1.msra.mxu0 %v759
        %791 = vmatprep.subr.mxu0 0.0
        %792 = vmatpush1.msra.mxu0 %v760
        %793 = vmatprep.subr.mxu0 0.0
        %794 = vmatpush1.msra.mxu0 %v761
        %795 = vmatprep.subr.mxu0 0.0
        %796 = vmatpush1.msra.mxu0 %v762
        %797 = vmatprep.subr.mxu0 0.0
        %798 = vmatpush1.msra.mxu0 %v763
        %799 = vmatprep.subr.mxu0 0.0
        %800 = vmatpush1.msra.mxu0 %v764
        %801 = vmatprep.subr.mxu0 0.0
        %802 = vmatpush1.msra.mxu0 %v765
        %803 = vmatprep.subr.mxu0 0.0
        %804 = vmatpush1.msra.mxu0 %v766
        %805 = vmatprep.subr.mxu0 0.0
        %806 = vmatpush1.msra.mxu0 %v767
        %807 = vmatprep.subr.mxu0 0.0
        %808 = vmatpush1.msra.mxu0 0.0
        %809 = vmatprep.subr.mxu0 0.0
        %810 = vmatpush1.msra.mxu0 0.0
        %811 = vmatprep.subr.mxu0 0.0
        %812 = vmatpush1.msra.mxu0 0.0
        %813 = vmatprep.subr.mxu0 0.0
        %814 = vmatpush1.msra.mxu0 0.0
        %815 = vmatprep.subr.mxu0 0.0
        %816 = vmatpush1.msra.mxu0 0.0
        %817 = vmatprep.subr.mxu0 0.0
        %818 = vmatpush1.msra.mxu0 0.0
        %819 = vmatprep.subr.mxu0 0.0
        %820 = vmatpush1.msra.mxu0 0.0
        %821 = vmatprep.subr.mxu0 0.0
        %822 = vmatpush1.msra.mxu0 0.0
        %823 = vmatprep.subr.mxu0 0.0
        %824 = vmatpush1.msra.mxu0 0.0
        %825 = vmatprep.subr.mxu0 0.0
        %826 = vmatpush1.msra.mxu0 0.0
        %827 = vmatprep.subr.mxu0 0.0
        %828 = vmatpush1.msra.mxu0 0.0
        %829 = vmatprep.subr.mxu0 0.0
        %830 = vmatpush1.msra.mxu0 0.0
        %831 = vmatprep.subr.mxu0 0.0
        %832 = vmatpush1.msra.mxu0 0.0
        %833 = vmatprep.subr.mxu0 0.0
        %834 = vmatpush1.msra.mxu0 0.0
        %835 = vmatprep.subr.mxu0 0.0
        %836 = vmatpush1.msra.mxu0 0.0
        %837 = vmatprep.subr.mxu0 0.0
        %838 = vmatpush1.msra.mxu0 0.0
        %839 = vmatprep.mubr.f32.mxu0 0.0
        %840 = vmatmul.mubr.f32.gmra.mrb[0].mxu0 %v749
        %v841 = vpop.f32.mrb[0].mxu0
        %v842 = vadd.f32 %v773, %v841
        %v843 = vpop.f32.mrb[0].mxu0
        %844 = vdwg.mxu0
        %v845 = vmax.f32 %v842, 0.0
        %v846 = vld [vmem:[%s8] sm:$0xff]
        %v847 = vld [vmem:[%s8 + $0x8] sm:$0xff]
        %v848 = vld [vmem:[%s8 + $0x10] sm:$0xff]
        %v849 = vld [vmem:[%s8 + $0x18] sm:$0xff]
        %v850 = vld [vmem:[%s8 + $0x20] sm:$0xff]
        %v851 = vld [vmem:[%s8 + $0x28] sm:$0xff]
        %v852 = vld [vmem:[%s8 + $0x30] sm:$0xff]
        %v853 = vld [vmem:[%s8 + $0x38] sm:$0xff]
        %v854 = vld [vmem:[%s8 + $0x40] sm:$0xff]
        %v855 = vld [vmem:[%s8 + $0x48] sm:$0xff]
        %v856 = vld [vmem:[%s8 + $0x50] sm:$0xff]
        %v857 = vld [vmem:[%s8 + $0x58] sm:$0xff]
        %v858 = vld [vmem:[%s8 + $0x60] sm:$0xff]
        %v859 = vld [vmem:[%s8 + $0x68] sm:$0xff]
        %v860 = vld [vmem:[%s8 + $0x70] sm:$0xff]
        %v861 = vld [vmem:[%s8 + $0x78] sm:$0xff]
        %v862 = vld [vmem:[%s9] sm:$0x1]
        %v864 = vlaneseq
        %v865 = vshrl.u32 %v864, 7
        %v866 = vsub.s32 0, %v865
        %v867 = vrot.slane %v862, %v866
        %869 = vmatprep.subr.mxu0 0.0
        %870 = vmatpush1.msra.mxu0 %v846
        %871 = vmatprep.subr.mxu0 0.0
        %872 = vmatpush1.msra.mxu0 %v847
        %873 = vmatprep.subr.mxu0 0.0
        %874 = vmatpush1.msra.mxu0 %v848
        %875 = vmatprep.subr.mxu0 0.0
        %876 = vmatpush1.msra.mxu0 %v849
        %877 = vmatprep.subr.mxu0 0.0
        %878 = vmatpush1.msra.mxu0 %v850
        %879 = vmatprep.subr.mxu0 0.0
        %880 = vmatpush1.msra.mxu0 %v851
        %881 = vmatprep.subr.mxu0 0.0
        %882 = vmatpush1.msra.mxu0 %v852
        %883 = vmatprep.subr.mxu0 0.0
        %884 = vmatpush1.msra.mxu0 %v853
        %885 = vmatprep.subr.mxu0 0.0
        %886 = vmatpush1.msra.mxu0 %v854
        %887 = vmatprep.subr.mxu0 0.0
        %888 = vmatpush1.msra.mxu0 %v855
        %889 = vmatprep.subr.mxu0 0.0
        %890 = vmatpush1.msra.mxu0 %v856
        %891 = vmatprep.subr.mxu0 0.0
        %892 = vmatpush1.msra.mxu0 %v857
        %893 = vmatprep.subr.mxu0 0.0
        %894 = vmatpush1.msra.mxu0 %v858
        %895 = vmatprep.subr.mxu0 0.0
        %896 = vmatpush1.msra.mxu0 %v859
        %897 = vmatprep.subr.mxu0 0.0
        %898 = vmatpush1.msra.mxu0 %v860
        %899 = vmatprep.subr.mxu0 0.0
        %900 = vmatpush1.msra.mxu0 %v861
        %901 = vmatprep.subr.mxu0 0.0
        %902 = vmatpush1.msra.mxu0 0.0
        %903 = vmatprep.subr.mxu0 0.0
        %904 = vmatpush1.msra.mxu0 0.0
        %905 = vmatprep.subr.mxu0 0.0
        %906 = vmatpush1.msra.mxu0 0.0
        %907 = vmatprep.subr.mxu0 0.0
        %908 = vmatpush1.msra.mxu0 0.0
        %909 = vmatprep.subr.mxu0 0.0
        %910 = vmatpush1.msra.mxu0 0.0
        %911 = vmatprep.subr.mxu0 0.0
        %912 = vmatpush1.msra.mxu0 0.0
        %913 = vmatprep.subr.mxu0 0.0
        %914 = vmatpush1.msra.mxu0 0.0
        %915 = vmatprep.subr.mxu0 0.0
        %916 = vmatpush1.msra.mxu0 0.0
        %917 = vmatprep.subr.mxu0 0.0
        %918 = vmatpush1.msra.mxu0 0.0
        %919 = vmatprep.subr.mxu0 0.0
        %920 = vmatpush1.msra.mxu0 0.0
        %921 = vmatprep.subr.mxu0 0.0
        %922 = vmatpush1.msra.mxu0 0.0
        %923 = vmatprep.subr.mxu0 0.0
        %924 = vmatpush1.msra.mxu0 0.0
        %925 = vmatprep.subr.mxu0 0.0
        %926 = vmatpush1.msra.mxu0 0.0
        %927 = vmatprep.subr.mxu0 0.0
        %928 = vmatpush1.msra.mxu0 0.0
        %929 = vmatprep.subr.mxu0 0.0
        %930 = vmatpush1.msra.mxu0 0.0
        %931 = vmatprep.subr.mxu0 0.0
        %932 = vmatpush1.msra.mxu0 0.0
        %933 = vmatprep.mubr.f32.mxu0 0.0
        %934 = vmatmul.mubr.f32.gmra.mrb[0].mxu0 %v845
        %v935 = vpop.f32.mrb[0].mxu0
        %v936 = vadd.f32 %v867, %v935
        %v937 = vpop.f32.mrb[0].mxu0
        %938 = vdwg.mxu0
        %v939 = vmax.f32 %v936, 0.0
        %v940 = vand.u32 2147483647, %v936
        %v941 = vsub.f32 0.0, %v940
        %v942 = vmul.f32 %v941, 1.442695
        %v943 = vpow.pop %v942
        %v944 = vadd.f32 %v943, 1.0
        %v945 = vlog2.pop %v944
        %v946 = vmul.f32 %v945, 0.6931472
        %v947 = vadd.f32 %v939, %v946
        %948 = vst [vmem:[%s463] sm:$0xff] %v947
        %949 = vst [vmem:[%s440] sm:$0xff] %v751
        %950 = vst [vmem:[%s447] sm:$0xff] %v749
        %p951 = scmp.lt.s32.totalorder %s30, 1
        %s952 = scalar_select %p951, %s30, 1
        %s953 = smul.addr %s952, 8
        %s954 = scalar_lea.vmem %s10, %s953
        %s955 = sand.u32 %s289, 1
        %s956 = scalar_lea.sflag [#allocation3], %s955
        %s957 = sand.u32 %s289, 1
        %s958 = smul.addr %s957, 8
        %s959 = scalar_lea.vmem [#allocation2], %s958
        %s960 = sand.u32 %s315, 1
        %s961 = scalar_lea.sflag [#allocation5], %s960
        %s962 = sand.u32 %s315, 1
        %s963 = smul.addr %s962, 8
        %s964 = scalar_lea.vmem [#allocation4], %s963
        // Predicated region
        $region61: #{norm_lstmb_forward.1} parent=59 // pred_check
          %p965 = pneg %p273
        $region62: #{norm_lstmb_forward.1} parent=59 // pred_check_branch
          %967 = sbr.rel (%p965) target = $region64
        $region63: #{norm_lstmb_forward.1} parent=59 // pred_region
          _
        $region64: #{norm_lstmb_forward.1} parent=59 // pred_fallthru
          _
        // Predicated region
        $region65: #{norm_lstmb_forward.1} parent=59 // pred_check
          %p968 = pneg %p299
        $region66: #{norm_lstmb_forward.1} parent=59 // pred_check_branch
          %970 = sbr.rel (%p968) target = $region68
        $region67: #{norm_lstmb_forward.1} parent=59 // pred_region
          %s972 = ssub.s32 128, 128
          %973 = vsyncadd %s956, %s972
          %s974 = smul.addr %s30, 128
          %s975 = scalar_lea.hbm %s11, %s974
          %s977 = sshll.u32 %s959, 4
          %s978 = int_to_ptr.vmem [resolvable:$true] %s977
          %980 = dma.vmem_to_hbm [thread:$0]  %s978, 128, %s975, %s956
        $region68: #{norm_lstmb_forward.1} parent=59 // pred_fallthru
          _
        // Predicated region
        $region69: #{norm_lstmb_forward.1} parent=59 // pred_check
          %p981 = pneg %p325
        $region70: #{norm_lstmb_forward.1} parent=59 // pred_check_branch
          %983 = sbr.rel (%p981) target = $region72
        $region71: #{norm_lstmb_forward.1} parent=59 // pred_region
          %s985 = ssub.s32 128, 128
          %986 = vsyncadd %s961, %s985
          %s987 = smul.addr %s30, 128
          %s988 = scalar_lea.hbm %s12, %s987
          %s990 = sshll.u32 %s964, 4
          %s991 = int_to_ptr.vmem [resolvable:$true] %s990
          %993 = dma.vmem_to_hbm [thread:$0]  %s991, 128, %s988, %s961
        $region72: #{norm_lstmb_forward.1} parent=59 // pred_fallthru
          _
      $region60: #{norm_lstmb_forward.1} parent=5 // pred_fallthru
        _
      %p994 = scmp.le.s32.totalorder 2, %s25
      // Predicated region
      $region73: #{norm_lstmb_forward.1} parent=5 // pred_check
        %p995 = pneg %p994
      $region74: #{norm_lstmb_forward.1} parent=5 // pred_check_branch
        %997 = sbr.rel (%p995) target = $region76
      $region75: #{norm_lstmb_forward.1} parent=5 // pred_region
        %s998 = ssub.s32 %s25, 2
        // Predicated region
        $region77: #{norm_lstmb_forward.1} parent=75 // pred_check
          %p999 = pneg %p279
        $region78: #{norm_lstmb_forward.1} parent=75 // pred_check_branch
          %1001 = sbr.rel (%p999) target = $region80
        $region79: #{norm_lstmb_forward.1} parent=75 // pred_region
          %p1002 = scmp.lt.s32.totalorder %s31, 1
          %s1003 = scalar_select %p1002, %s31, 1
          %s1004 = smul.addr %s1003, 8
          %s1005 = scalar_lea.vmem %s10, %s1004
        $region80: #{norm_lstmb_forward.1} parent=75 // pred_fallthru
          _
        // Predicated region
        $region81: #{norm_lstmb_forward.1} parent=75 // pred_check
          %p1006 = pneg %p305
        $region82: #{norm_lstmb_forward.1} parent=75 // pred_check_branch
          %1008 = sbr.rel (%p1006) target = $region84
        $region83: #{norm_lstmb_forward.1} parent=75 // pred_region
          %s1009 = sand.u32 %s290, 1
          %s1010 = scalar_lea.sflag [#allocation3], %s1009
          %s1011 = sand.u32 %s290, 1
          %s1012 = smul.addr %s1011, 8
          %s1013 = scalar_lea.vmem [#allocation2], %s1012
          %1014 = dma.done %s1010, 128
        $region84: #{norm_lstmb_forward.1} parent=75 // pred_fallthru
          _
        // Predicated region
        $region85: #{norm_lstmb_forward.1} parent=75 // pred_check
          %p1015 = pneg %p331
        $region86: #{norm_lstmb_forward.1} parent=75 // pred_check_branch
          %1017 = sbr.rel (%p1015) target = $region88
        $region87: #{norm_lstmb_forward.1} parent=75 // pred_region
          %s1018 = sand.u32 %s316, 1
          %s1019 = scalar_lea.sflag [#allocation5], %s1018
          %s1020 = sand.u32 %s316, 1
          %s1021 = smul.addr %s1020, 8
          %s1022 = scalar_lea.vmem [#allocation4], %s1021
          %1023 = dma.done %s1019, 128
        $region88: #{norm_lstmb_forward.1} parent=75 // pred_fallthru
          _
      $region76: #{norm_lstmb_forward.1} parent=5 // pred_fallthru
        _
    $region6: #{norm_lstmb_forward.1} parent=1 // loop_footer
      %s29 = sadd.s32 1, %s25
    $region7: #{norm_lstmb_forward.1} parent=1 // loop_footer_branch
      %24 = sbr.rel target = $region3
    $region8: #{norm_lstmb_forward.1} parent=1 // loop_exit
      _
    %1024 = vsyncpa [#allocation3], 1
    %s1025 = scalar_lea.sflag [#allocation3], 1
    %1026 = vsyncpa %s1025, 1
    %1027 = vsyncpa [#allocation5], 1
    %s1028 = scalar_lea.sflag [#allocation5], 1
    %1029 = vsyncpa %s1028, 1

</llo_original>
